<compile_context>
chip_gen: v7x
topology: tpu7x:2x2x1
jax: 0.10.0
libtpu: 0.0.40
codegen_flags: <defaults>
</compile_context>

<pallas_src>
import jax
import jax.numpy as jnp
from jax.experimental import pallas as pl
from jax.experimental.pallas import tpu as pltpu


def _round_up(x, m):
    return (x + m - 1) // m * m


def _round_down(x, m):
    return x // m * m


def _weight_norm_jnp(kernel, scale):
    # Plain-XLA path for tiny weights / fallback.  Matches PyTorch exactly
    # (sqrt of sum of squares, then scale / norm broadcast multiply).
    var = jnp.sqrt(jnp.sum(jnp.square(kernel.astype(jnp.float32)), axis=(1, 2, 3)))
    col = (scale.astype(jnp.float32) / var)[:, None, None, None]
    return (col * kernel.astype(jnp.float32)).astype(kernel.dtype)


def _weight_norm_kernel(scale_ref, k_ref, o_ref):
    # scale_ref: (O_ceil, 1) f32, resident in VMEM (constant block index).
    # k_ref / o_ref: (TO, D) tiles of the flattened weight.
    to = k_ref.shape[0]
    row0 = pl.multiple_of(pl.program_id(0) * to, 8)
    col_scale = scale_ref[pl.ds(row0, to), :]                     # (TO, 1)

    kf = k_ref[...].astype(jnp.float32)
    sq_sum = jnp.sum(kf * kf, axis=-1, keepdims=True)             # (TO, 1) XLU reduce
    col = col_scale * jax.lax.rsqrt(sq_sum)                       # (TO, 1) EUP rsqrt

    # Re-read the tile for the rescale (avoids keeping the wide f32 upcast
    # live across the reduction for narrow input dtypes).
    o_ref[...] = (k_ref[...].astype(jnp.float32) * col).astype(o_ref.dtype)


def weight_norm(kernel, scale, *,
                vmem_budget_bytes=12 * 1024 * 1024,
                small_bytes_threshold=256 * 1024,
                min_grid=16):
    """kernel: (O, I, kH, kW); scale: (O,).  Returns (scale/||k||_2) * kernel."""
    O, I, kH, kW = kernel.shape
    D = I * kH * kW
    itemsize = jnp.dtype(kernel.dtype).itemsize
    total_bytes = O * D * itemsize

    # Tiny weights: fixed pallas_call / per-step cost dominates; let XLA fuse.
    if total_bytes < small_bytes_threshold:
        return _weight_norm_jnp(kernel, scale)

    row_bytes = D * itemsize
    # Row-tile selection:
    #  (a) VMEM: in+out tiles double-buffered (4x) plus ~2x f32 temporaries.
    #  (b) tile bytes in the ~0.5-2 MiB sweet spot (DMA efficiency saturates).
    #  (c) grid depth >= min_grid so pipeline fill/drain is amortized and the
    #      "parallel" axis can feed both v7x TensorCores.
    cap_vmem = vmem_budget_bytes // (6 * row_bytes)
    cap_tile = (2 * 1024 * 1024) // row_bytes
    cap_grid = max(O // min_grid, 8)
    TO = min(cap_vmem, cap_tile, cap_grid, _round_up(O, 8))
    TO = max(8, _round_down(TO, 8))

    grid = pl.cdiv(O, TO)
    O_ceil = grid * TO

    # Estimated VMEM need: in/out tiles (double-buffered) + f32 temporaries +
    # resident scale column (padded to 128 lanes) + slack.
    needed_vmem = (4 * TO * D * itemsize
                   + 2 * TO * D * 4
                   + 2 * O_ceil * 512
                   + (1 << 20))
    if needed_vmem > 28 * 1024 * 1024:
        # TODO(synk): add a D-chunked (two grid axes, partial-sum accumulator)
        # path for extremely wide flattened rows; fall back to XLA for now.
        return _weight_norm_jnp(kernel, scale)

    k2d = kernel.reshape(O, D)                                   # free reshape
    scale_col = jnp.pad(scale.astype(jnp.float32).reshape(O, 1),
                        ((0, O_ceil - O), (0, 0)))               # tiny pad (O elems)

    out2d = pl.pallas_call(
        _weight_norm_kernel,
        out_shape=jax.ShapeDtypeStruct((O, D), kernel.dtype),
        grid=(grid,),
        in_specs=[
            # Whole scale column, resident (constant block index => one DMA).
            pl.BlockSpec((O_ceil, 1), lambda i: (0, 0)),
            # Full-extent D block; ragged last O tile via implicit padding.
            pl.BlockSpec((TO, D), lambda i: (i, 0)),
        ],
        out_specs=pl.BlockSpec((TO, D), lambda i: (i, 0)),
        compiler_params=pltpu.CompilerParams(
            dimension_semantics=("parallel",),
            vmem_limit_bytes=32 * 1024 * 1024),
        cost_estimate=pl.CostEstimate(
            flops=int(3 * O * D),
            transcendentals=int(O),
            bytes_accessed=int(2 * O * D * itemsize + 2 * O * 4),
        ),
    )(scale_col, k2d)

    return out2d.reshape(O, I, kH, kW)


def _reference(kernel, scale):
    var = jnp.sqrt(jnp.sum(kernel.astype(jnp.float32) ** 2, axis=(1, 2, 3)))
    return ((scale / var)[:, None, None, None] * kernel).astype(kernel.dtype)


if __name__ == "__main__":
    key = jax.random.PRNGKey(0)
    k1, k2, k3, k4 = jax.random.split(key, 4)

    # 1) Module-default small shape (channels=4, 3x3 conv kernel, scale=0.1):
    #    routed through the tiny-weight jnp fallback.
    kernel1 = jax.random.normal(k1, (4, 4, 3, 3), dtype=jnp.float32)
    scale1 = jnp.ones((4,), dtype=jnp.float32) * 0.1
    out1 = jax.block_until_ready(weight_norm(kernel1, scale1))
    assert out1.shape == kernel1.shape
    assert jnp.allclose(out1, _reference(kernel1, scale1), atol=1e-5, rtol=1e-5)

    # 2) Multi-tile pipelined Pallas path (deep grid, no host pad/slice).
    kernel2 = jax.random.normal(k2, (256, 64, 3, 3), dtype=jnp.float32)
    scale2 = jnp.ones((256,), dtype=jnp.float32) * 0.1
    out2 = jax.block_until_ready(weight_norm(kernel2, scale2))
    assert jnp.allclose(out2, _reference(kernel2, scale2), atol=1e-5, rtol=1e-5)

    # 3) Ragged O (not a multiple of the row tile): exercises the implicit
    #    last-tile padding path (garbage rows discarded on writeback).
    kernel3 = jax.random.normal(k3, (250, 64, 3, 3), dtype=jnp.float32)
    scale3 = jax.random.uniform(k4, (250,), dtype=jnp.float32) + 0.5
    out3 = jax.block_until_ready(weight_norm(kernel3, scale3))
    assert jnp.allclose(out3, _reference(kernel3, scale3), atol=1e-5, rtol=1e-5)

    print("KERNEL_OK")
</pallas_src>

<mosaic_0001>
module attributes {stable_mosaic.version = 11 : i64} {
  func.func @_weight_norm_kernel(%arg0: i32, %arg1: memref<256x1xf32, #tpu.memory_space<vmem>>, %arg2: memref<16x576xf32, #tpu.memory_space<vmem>>, %arg3: memref<16x576xf32, #tpu.memory_space<vmem>>) attributes {dimension_semantics = [#tpu.dimension_semantics<parallel>], iteration_bounds = array<i64: 16>, scalar_prefetch = 0 : i64, scratch_operands = 0 : i64, tpu.core_type = #tpu.core_type<tc>, window_params = [{pipeline_mode = #tpu.pipeline_mode<synchronous>, transform_indices = @transform_0, window_bounds = array<i64: 256, 1>}, {transform_indices = @transform_1, window_bounds = array<i64: 16, 576>}, {transform_indices = @transform_2, window_bounds = array<i64: 16, 576>}]} {
    %c16_i32 = arith.constant 16 : i32
    %0 = arith.muli %arg0, %c16_i32 : i32
    %1 = tpu.assume_multiple %0, 8 : i32
    %2 = arith.index_cast %1 : i32 to index
    %c0 = arith.constant 0 : index
    %3 = vector.load %arg1[%2, %c0] : memref<256x1xf32, #tpu.memory_space<vmem>>, vector<16x1xf32>
    %c0_0 = arith.constant 0 : index
    %c0_1 = arith.constant 0 : index
    %4 = vector.load %arg2[%c0_0, %c0_1] : memref<16x576xf32, #tpu.memory_space<vmem>>, vector<16x576xf32>
    %5 = arith.mulf %4, %4 : vector<16x576xf32>
    %cst = arith.constant dense<0.000000e+00> : vector<16xf32>
    %6 = vector.multi_reduction <add>, %5, %cst [1] : vector<16x576xf32> to vector<16xf32>
    %7 = vector.shape_cast %6 : vector<16xf32> to vector<16x1xf32>
    %8 = math.rsqrt %7 : vector<16x1xf32>
    %9 = arith.mulf %3, %8 : vector<16x1xf32>
    %c0_2 = arith.constant 0 : index
    %c0_3 = arith.constant 0 : index
    %10 = vector.load %arg2[%c0_2, %c0_3] : memref<16x576xf32, #tpu.memory_space<vmem>>, vector<16x576xf32>
    %11 = vector.broadcast %9 : vector<16x1xf32> to vector<16x576xf32>
    %12 = arith.mulf %10, %11 : vector<16x576xf32>
    %c0_4 = arith.constant 0 : index
    %c0_5 = arith.constant 0 : index
    %13 = vector.load %arg3[%c0_4, %c0_5] : memref<16x576xf32, #tpu.memory_space<vmem>>, vector<16x576xf32>
    tpu.vector_store %arg3[%c0_4, %c0_5], %12 {strides = array<i32>} : memref<16x576xf32, #tpu.memory_space<vmem>>, vector<16x576xf32>,
    return
  }
  func.func @transform_0(%arg0: i32) -> (i32, i32) {
    %c0_i32 = arith.constant 0 : i32
    %c0_i32_0 = arith.constant 0 : i32
    %c0_i32_1 = arith.constant 0 : i32
    return %c0_i32, %c0_i32_0 : i32, i32
  }
  func.func @transform_1(%arg0: i32) -> (i32, i32) {
    %c0_i32 = arith.constant 0 : i32
    %c0_i32_0 = arith.constant 0 : i32
    return %arg0, %c0_i32 : i32, i32
  }
  func.func @transform_2(%arg0: i32) -> (i32, i32) {
    %c0_i32 = arith.constant 0 : i32
    %c0_i32_0 = arith.constant 0 : i32
    return %arg0, %c0_i32 : i32, i32
  }
}

</mosaic_0001>

<llo_original>
// kernel: tpu_custom_call.1
$region0: #{tpu_custom_call.1}
  #allocation0 [shape = 'u32[]', space=smem, size = 0x4, offset = 0x4, fixed_abs, tag = 'smem constant byte address 0x4 - core index']
  #allocation1 [shape = 'u32[144,128]{1,0:T(1,128)}', space=vmem, size = 0x12000, scoped, tag = 'internal scratch']
  %s0 = inlined_call_operand.vmem [shape: f32[256,1], index: 0, kind: input, shape index: {}]
  %s1 = inlined_call_operand.vmem [shape: f32[256,576], index: 1, kind: input, shape index: {}]
  %s2 = inlined_call_operand.vmem [shape: f32[256,576], index: 2, kind: output, shape index: {}]
  %s3 = sld [smem:[#allocation0]]
  $region41: #{tpu_custom_call.1} parent=0
    _
  %s5 = ssub.s32 1, %s3
  %s6 = scalar_select 0, %s5, %s3
  loop: start=0, step=1, limit=18
  $region2: #{tpu_custom_call.1} parent=0 // loop_pre_header
    _
  $region3: #{tpu_custom_call.1} parent=0 // loop_header
    %s8 = sphi 0, %s12
    %p9 = scmp.ge.s32.totalorder %s8, 18
    %s16 = sphi 0, %s16
    %s18 = sphi 0, %s16
    %s19 = sphi 0, %s18
    %s33 = sphi 0, %s19
    %s39 = sphi 0, %s41
    %s42 = sphi 0, %s39
    %s43 = sphi 0, %s42
    %s59 = sphi 0, %s43
    %s65 = sphi 0, %s67
    %s68 = sphi 0, %s65
    %s69 = sphi 0, %s68
    %s85 = sphi 0, %s69
  $region4: #{tpu_custom_call.1} parent=0 // loop_header_branch
    %11 = sbr.rel (%p9) target = $region8
  $region5: #{tpu_custom_call.1} parent=0 // loop_body
    %s13 = ssub.s32 %s8, 1
    %s14 = ssub.s32 %s8, 2
    %s15 = sadd.s32 %s8, 1
    %s17 = sadd.s32 %s16, 1
    %p20 = scmp.eq.s32.totalorder %s8, 15
    %p21 = scmp.ne.s32.totalorder %s16, %s18
    %p22 = scmp.eq.s32.totalorder %s8, 0
    %p23 = por %p21, %p22
    %p24 = scmp.ne.s32.totalorder %s16, %s18
    %p25 = scmp.eq.s32.totalorder %s13, 15
    %p26 = por %p24, %p25
    %p27 = scmp.ne.s32.totalorder %s18, %s19
    %p28 = scmp.eq.s32.totalorder %s13, 0
    %p29 = por %p27, %p28
    %p30 = scmp.ne.s32.totalorder %s18, %s19
    %p31 = scmp.eq.s32.totalorder %s14, 15
    %p32 = por %p30, %p31
    %p34 = scmp.ne.s32.totalorder %s19, %s33
    %p35 = scmp.eq.s32.totalorder %s14, 0
    %p36 = por %p34, %p35
    %s37 = ssub.s32 %s8, %s15
    %p38 = scmp.eq.s32.totalorder %s37, 0
    %s40 = sadd.s32 %s39, 1
    %s41 = scalar_select %p38, %s39, %s40
    %p44 = pneg %p38
    %p45 = scmp.eq.s32.totalorder %s8, 15
    %p46 = por %p44, %p45
    %p47 = scmp.ne.s32.totalorder %s39, %s42
    %p48 = scmp.eq.s32.totalorder %s8, 0
    %p49 = por %p47, %p48
    %p50 = scmp.ne.s32.totalorder %s39, %s42
    %p51 = scmp.eq.s32.totalorder %s13, 15
    %p52 = por %p50, %p51
    %p53 = scmp.ne.s32.totalorder %s42, %s43
    %p54 = scmp.eq.s32.totalorder %s13, 0
    %p55 = por %p53, %p54
    %p56 = scmp.ne.s32.totalorder %s42, %s43
    %p57 = scmp.eq.s32.totalorder %s14, 15
    %p58 = por %p56, %p57
    %p60 = scmp.ne.s32.totalorder %s43, %s59
    %p61 = scmp.eq.s32.totalorder %s14, 0
    %p62 = por %p60, %p61
    %s63 = ssub.s32 %s8, %s15
    %p64 = scmp.eq.s32.totalorder %s63, 0
    %s66 = sadd.s32 %s65, 1
    %s67 = scalar_select %p64, %s65, %s66
    %p70 = pneg %p64
    %p71 = scmp.eq.s32.totalorder %s8, 15
    %p72 = por %p70, %p71
    %p73 = scmp.ne.s32.totalorder %s65, %s68
    %p74 = scmp.eq.s32.totalorder %s8, 0
    %p75 = por %p73, %p74
    %p76 = scmp.ne.s32.totalorder %s65, %s68
    %p77 = scmp.eq.s32.totalorder %s13, 15
    %p78 = por %p76, %p77
    %p79 = scmp.ne.s32.totalorder %s68, %s69
    %p80 = scmp.eq.s32.totalorder %s13, 0
    %p81 = por %p79, %p80
    %p82 = scmp.ne.s32.totalorder %s68, %s69
    %p83 = scmp.eq.s32.totalorder %s14, 15
    %p84 = por %p82, %p83
    %p86 = scmp.ne.s32.totalorder %s69, %s85
    %p87 = scmp.eq.s32.totalorder %s14, 0
    %p88 = por %p86, %p87
    %p89 = scmp.le.s32.totalorder 1, %s8
    %p90 = scmp.lt.s32.totalorder %s8, 17
    %p91 = pnand %p89, %p90
    %p92 = pneg %p91
    // Predicated region
    $region9: #{tpu_custom_call.1} parent=5 // pred_check
      _
    $region10: #{tpu_custom_call.1} parent=5 // pred_check_branch
      %94 = sbr.rel (%p91) target = $region12
    $region11: #{tpu_custom_call.1} parent=5 // pred_region
      %s95 = ssub.s32 %s8, 1
      // Predicated region
      $region13: #{tpu_custom_call.1} parent=11 // pred_check
        %p96 = pneg %p29
      $region14: #{tpu_custom_call.1} parent=11 // pred_check_branch
        %98 = sbr.rel (%p96) target = $region16
      $region15: #{tpu_custom_call.1} parent=11 // pred_region
        _
      $region16: #{tpu_custom_call.1} parent=11 // pred_fallthru
        _
    $region12: #{tpu_custom_call.1} parent=5 // pred_fallthru
      _
    %p99 = scmp.lt.s32.totalorder %s8, 16
    // Predicated region
    $region17: #{tpu_custom_call.1} parent=5 // pred_check
      %p100 = pneg %p99
    $region18: #{tpu_custom_call.1} parent=5 // pred_check_branch
      %102 = sbr.rel (%p100) target = $region20
    $region19: #{tpu_custom_call.1} parent=5 // pred_region
      // Predicated region
      $region21: #{tpu_custom_call.1} parent=19 // pred_check
        %p103 = pneg %p49
      $region22: #{tpu_custom_call.1} parent=19 // pred_check_branch
        %105 = sbr.rel (%p103) target = $region24
      $region23: #{tpu_custom_call.1} parent=19 // pred_region
        %s106 = smul.u32 2, %s8
        %p107 = scmp.lt.s32.totalorder %s106, 31
        %s108 = scalar_select %p107, %s106, 31
        %s109 = smul.addr %s108, 5
        %s110 = smul.addr %s109, 8
        %s111 = scalar_lea.vmem %s1, %s110
        %s112 = smul.u32 2, %s8
      $region24: #{tpu_custom_call.1} parent=19 // pred_fallthru
        _
    $region20: #{tpu_custom_call.1} parent=5 // pred_fallthru
      _
    %p113 = scmp.le.s32.totalorder 1, %s8
    %p114 = scmp.lt.s32.totalorder %s8, 17
    %p115 = pnand %p113, %p114
    %p116 = pneg %p115
    // Predicated region
    $region25: #{tpu_custom_call.1} parent=5 // pred_check
      _
    $region26: #{tpu_custom_call.1} parent=5 // pred_check_branch
      %118 = sbr.rel (%p115) target = $region28
    $region27: #{tpu_custom_call.1} parent=5 // pred_region
      %s119 = ssub.s32 %s8, 1
      %p120 = pneg %p29
      %p121 = pneg %p26
      %s122 = smul.u32 2, %s13
      %p123 = scmp.lt.s32.totalorder %s122, 31
      %s124 = scalar_select %p123, %s122, 31
      %s125 = smul.addr %s124, 5
      %s126 = smul.addr %s125, 8
      %s127 = scalar_lea.vmem %s1, %s126
      %p128 = pneg %p55
      %p129 = pneg %p52
      %p130 = pneg %p81
      %p131 = pneg %p78
      %s132 = smul.u32 2, %s13
      %p133 = scmp.lt.s32.totalorder %s132, 31
      %s134 = scalar_select %p133, %s132, 31
      %s135 = smul.addr %s134, 5
      %s136 = smul.addr %s135, 8
      %s137 = scalar_lea.vmem %s2, %s136
      %s138 = smul.u32 2, %s13
      %p139 = scmp.lt.s32.totalorder %s138, 31
      %s140 = scalar_select %p139, %s138, 31
      %s141 = smul.addr %s140, 5
      %s142 = smul.addr %s141, 8
      %s143 = scalar_lea.vmem %s1, %s142
      %s144 = smul.u32 2, %s13
      %s145 = smul.u32 2, %s13
      %p146 = scmp.lt.s32.totalorder %s145, 31
      %s147 = scalar_select %p146, %s145, 31
      %s148 = smul.addr %s147, 5
      %s149 = smul.addr %s148, 8
      %s150 = scalar_lea.vmem %s2, %s149
      %s151 = smul.u32 2, %s13
      %s152 = smul.u32 %s13, 16
      %s153 = scalar_lea.vmem %s0, %s152
      %v154 = vld [vmem:[%s153] sm:$0xff]
      %v155 = vld [vmem:[%s153 + $0x8] sm:$0xff]
      %v156 = vld [vmem:[%s143] sm:$0xff]
      %v157 = vld [vmem:[%s143 + $0x8] sm:$0xff]
      %v158 = vld [vmem:[%s143 + $0x10] sm:$0xff]
      %v159 = vld [vmem:[%s143 + $0x18] sm:$0xff]
      %v160 = vld [vmem:[%s143 + $0x20] sm:$0xff]
      %v161 = vld [vmem:[%s143 + $0x28] sm:$0xff]
      %v162 = vld [vmem:[%s143 + $0x30] sm:$0xff]
      %v163 = vld [vmem:[%s143 + $0x38] sm:$0xff]
      %v164 = vld [vmem:[%s143 + $0x40] sm:$0xff]
      %v165 = vld [vmem:[%s143 + $0x48] sm:$0xff]
      %v166 = vmul.f32 %v156, %v156
      %v167 = vmul.f32 %v157, %v157
      %v168 = vmul.f32 %v158, %v158
      %v169 = vmul.f32 %v159, %v159
      %v170 = vmul.f32 %v160, %v160
      %v171 = vmul.f32 %v161, %v161
      %v172 = vmul.f32 %v162, %v162
      %v173 = vmul.f32 %v163, %v163
      %v174 = vmul.f32 %v164, %v164
      %v175 = vmul.f32 %v165, %v165
      %v176 = vadd.f32 %v166, %v167
      %v177 = vadd.f32 %v176, %v168
      %v178 = vadd.f32 %v177, %v169
      %vm179 = vcmask 523264
      %v180 = vsel %vm179, %v170, 0.0
      %v181 = vadd.f32 %v178, %v180
      %182 = vadd.xlane.f32.xlu0 %v181
      %v183 = vpop.xlane.xlu0 %182
      %v184 = vadd.f32 %v171, %v172
      %v185 = vadd.f32 %v184, %v173
      %v186 = vadd.f32 %v185, %v174
      %v187 = vsel %vm179, %v175, 0.0
      %v188 = vadd.f32 %v186, %v187
      %189 = vadd.xlane.f32.xlu0 %v188
      %v190 = vpop.xlane.xlu0 %189
      %v191 = vrsqrt.pop %v183
      %v192 = vrsqrt.pop %v190
      %v193 = vmul.f32 %v154, %v191
      %v194 = vmul.f32 %v155, %v192
      %196 = vset.pattern.permute.xlu0 0
      %197 = vperm.xlu0 %196, %v193
      %v198 = vpop.permute.xlu0 %197
      %201 = vset.pattern.permute.xlu0 0
      %202 = vperm.xlu0 %201, %v194
      %v203 = vpop.permute.xlu0 %202
      %v205 = vmul.f32 %v156, %v198
      %v206 = vmul.f32 %v157, %v198
      %v207 = vmul.f32 %v158, %v198
      %v208 = vmul.f32 %v159, %v198
      %v209 = vmul.f32 %v160, %v198
      %v210 = vmul.f32 %v161, %v203
      %v211 = vmul.f32 %v162, %v203
      %v212 = vmul.f32 %v163, %v203
      %v213 = vmul.f32 %v164, %v203
      %v214 = vmul.f32 %v165, %v203
      %215 = vst [vmem:[%s150] sm:$0xff] %v205
      %216 = vst [vmem:[%s150 + $0x8] sm:$0xff] %v206
      %217 = vst [vmem:[%s150 + $0x10] sm:$0xff] %v207
      %218 = vst [vmem:[%s150 + $0x18] sm:$0xff] %v208
      %219 = vst.msk [vmem:[%s150 + $0x20] sm:$0xff] %vm179, %v209
      %220 = vst [vmem:[%s150 + $0x28] sm:$0xff] %v210
      %221 = vst [vmem:[%s150 + $0x30] sm:$0xff] %v211
      %222 = vst [vmem:[%s150 + $0x38] sm:$0xff] %v212
      %223 = vst [vmem:[%s150 + $0x40] sm:$0xff] %v213
      %224 = vst.msk [vmem:[%s150 + $0x48] sm:$0xff] %vm179, %v214
      %s225 = smul.u32 2, %s13
      %p226 = scmp.lt.s32.totalorder %s225, 31
      %s227 = scalar_select %p226, %s225, 31
      %s228 = smul.addr %s227, 5
      %s229 = smul.addr %s228, 8
      %s230 = scalar_lea.vmem %s2, %s229
      // Predicated region
      $region29: #{tpu_custom_call.1} parent=27 // pred_check
        %p231 = pneg %p78
      $region30: #{tpu_custom_call.1} parent=27 // pred_check_branch
        %233 = sbr.rel (%p231) target = $region32
      $region31: #{tpu_custom_call.1} parent=27 // pred_region
        %s234 = smul.u32 2, %s13
      $region32: #{tpu_custom_call.1} parent=27 // pred_fallthru
        _
    $region28: #{tpu_custom_call.1} parent=5 // pred_fallthru
      _
    %p235 = scmp.le.s32.totalorder 2, %s8
    // Predicated region
    $region33: #{tpu_custom_call.1} parent=5 // pred_check
      %p236 = pneg %p235
    $region34: #{tpu_custom_call.1} parent=5 // pred_check_branch
      %238 = sbr.rel (%p236) target = $region36
    $region35: #{tpu_custom_call.1} parent=5 // pred_region
      %s239 = ssub.s32 %s8, 2
      // Predicated region
      $region37: #{tpu_custom_call.1} parent=35 // pred_check
        %p240 = pneg %p84
      $region38: #{tpu_custom_call.1} parent=35 // pred_check_branch
        %242 = sbr.rel (%p240) target = $region40
      $region39: #{tpu_custom_call.1} parent=35 // pred_region
        %s243 = smul.u32 2, %s14
        %p244 = scmp.lt.s32.totalorder %s243, 31
        %s245 = scalar_select %p244, %s243, 31
        %s246 = smul.addr %s245, 5
        %s247 = smul.addr %s246, 8
        %s248 = scalar_lea.vmem %s2, %s247
      $region40: #{tpu_custom_call.1} parent=35 // pred_fallthru
        _
    $region36: #{tpu_custom_call.1} parent=5 // pred_fallthru
      _
  $region6: #{tpu_custom_call.1} parent=0 // loop_footer
    %s12 = sadd.s32 1, %s8
  $region7: #{tpu_custom_call.1} parent=0 // loop_footer_branch
    %7 = sbr.rel target = $region3
  $region8: #{tpu_custom_call.1} parent=0 // loop_exit
    _

</llo_original>
